<compile_context>
chip_gen: v7x
topology: tpu7x:2x2x1
jax: 0.10.0
libtpu: 0.0.40
codegen_flags: <defaults>
</compile_context>

<pallas_src>
import functools

import jax
import jax.numpy as jnp
from jax.experimental import pallas as pl
from jax.experimental.pallas import tpu as pltpu


def _round_up(x, m):
    return (x + m - 1) // m * m


def _vit_output_kernel(x_ref, w_ref, b_ref, res_ref, o_ref):
    # x_ref:   (TM, I)  bf16 hidden_states tile (pipelined)
    # w_ref:   (I, H)   bf16 dense weight (transposed vs torch), VMEM-resident
    # b_ref:   (1, H)   f32  dense bias, VMEM-resident
    # res_ref: (TM, H)  residual (input_tensor) tile (pipelined)
    # o_ref:   (TM, H)  output tile
    y = jnp.dot(x_ref[...], w_ref[...], preferred_element_type=jnp.float32)
    y = y + b_ref[...] + res_ref[...].astype(jnp.float32)
    o_ref[...] = y.astype(o_ref.dtype)


@functools.partial(jax.jit, static_argnames=("tile_m", "compute_dtype"))
def vit_output(hidden_states, input_tensor, weight, bias, *,
               tile_m=None, compute_dtype=jnp.bfloat16):
    """ViTOutput forward.

    hidden_states: [B, S, I], input_tensor: [B, S, H],
    weight: [H, I] (torch nn.Linear layout), bias: [H]  ->  [B, S, H].
    """
    B, S, I = hidden_states.shape
    H = input_tensor.shape[-1]
    M = B * S

    if tile_m is None:
        # Target ~256 tokens/tile, then shrink so the grid covers M with at
        # most 8 rows of padding per tile (keeps sublane alignment, avoids
        # padding a whole extra MXU tile for non-divisible token counts).
        target = 256
        num_tiles = max(1, pl.cdiv(M, target))
        tile_m = _round_up(pl.cdiv(M, num_tiles), 8)
    else:
        tile_m = min(_round_up(tile_m, 8), _round_up(M, 8))

    M_pad = _round_up(M, tile_m)
    grid = (M_pad // tile_m,)

    # Feed the MXU bf16 (f32 accumulate inside the kernel); also halves HBM
    # traffic for x and the weight (the dominant streams).
    x = hidden_states.reshape(M, I).astype(compute_dtype)
    w_t = weight.T.astype(compute_dtype)            # [I, H]
    res = input_tensor.reshape(M, H)
    b2d = bias.reshape(1, H).astype(jnp.float32)    # cast once, not per tile

    if M_pad != M:
        pad = M_pad - M
        x = jnp.pad(x, ((0, pad), (0, 0)))
        res = jnp.pad(res, ((0, pad), (0, 0)))

    out_dtype = input_tensor.dtype

    # VMEM footprint: double-buffered x/res/out tiles + resident weight/bias
    # (still allocated double-buffered by the pipeline).  Clamp to 64 MiB so
    # the limit is valid on every generation (v7x has 64 MiB physical VMEM/TC).
    cbytes = jnp.dtype(compute_dtype).itemsize
    vmem_needed = (2 * tile_m * I * cbytes
                   + 2 * tile_m * H * jnp.dtype(res.dtype).itemsize
                   + 2 * tile_m * H * jnp.dtype(out_dtype).itemsize
                   + 2 * I * H * cbytes
                   + 2 * H * 4)
    vmem_limit = int(min(max(2 * vmem_needed, 32 * 1024 * 1024),
                         64 * 1024 * 1024))

    out = pl.pallas_call(
        _vit_output_kernel,
        out_shape=jax.ShapeDtypeStruct((M_pad, H), out_dtype),
        grid_spec=pltpu.PrefetchScalarGridSpec(
            num_scalar_prefetch=0,
            grid=grid,
            in_specs=[
                pl.BlockSpec((tile_m, I), lambda i: (i, 0)),  # x tile (pipelined)
                pl.BlockSpec((I, H), lambda i: (0, 0)),       # weight (resident)
                pl.BlockSpec((1, H), lambda i: (0, 0)),       # bias (resident)
                pl.BlockSpec((tile_m, H), lambda i: (i, 0)),  # residual tile
            ],
            out_specs=pl.BlockSpec((tile_m, H), lambda i: (i, 0)),
        ),
        compiler_params=pltpu.CompilerParams(
            dimension_semantics=("parallel",),   # megacore sharding on v7x
            vmem_limit_bytes=vmem_limit,
        ),
    )(x, w_t, b2d, res)

    return out[:M].reshape(B, S, H)


def reference(hidden_states, input_tensor, weight, bias, compute_dtype=jnp.bfloat16):
    x = hidden_states.astype(compute_dtype)
    w = weight.astype(compute_dtype)
    y = jnp.einsum("bsi,hi->bsh", x, w, preferred_element_type=jnp.float32)
    y = y + bias.astype(jnp.float32) + input_tensor.astype(jnp.float32)
    return y.astype(input_tensor.dtype)


if __name__ == "__main__":
    # Small ViT-like config: intermediate_size=256, hidden_size=128,
    # seq=100 (non-multiple of 8*tile so padding / adaptive-tile paths run).
    B, S, INTER, HID = 2, 100, 256, 128

    key = jax.random.PRNGKey(0)
    k1, k2, k3, k4 = jax.random.split(key, 4)

    hidden_states = jax.random.normal(k1, (B, S, INTER), dtype=jnp.float32)
    input_tensor = jax.random.normal(k2, (B, S, HID), dtype=jnp.float32)
    # torch nn.Linear layout: weight [H, I], bias [H]
    weight = jax.random.normal(k3, (HID, INTER), dtype=jnp.float32) * 0.02
    bias = jax.random.normal(k4, (HID,), dtype=jnp.float32) * 0.02

    ref = reference(hidden_states, input_tensor, weight, bias)

    # Default (adaptive) tile selection: M=200 -> single 200-row tile, no pad.
    out = jax.block_until_ready(
        vit_output(hidden_states, input_tensor, weight, bias))
    assert out.shape == (B, S, HID)
    err = float(jnp.max(jnp.abs(out.astype(jnp.float32) - ref.astype(jnp.float32))))
    assert jnp.allclose(out, ref, atol=5e-3, rtol=5e-3), \
        f"mismatch vs reference (default tile), max abs err={err}"

    # Explicit small tile: M=200 padded to 256, grid=(4,) -> multi-step
    # pipelined grid plus a padded tail tile.
    out2 = jax.block_until_ready(
        vit_output(hidden_states, input_tensor, weight, bias, tile_m=64))
    err2 = float(jnp.max(jnp.abs(out2.astype(jnp.float32) - ref.astype(jnp.float32))))
    assert jnp.allclose(out2, ref, atol=5e-3, rtol=5e-3), \
        f"mismatch vs reference (tile_m=64), max abs err={err2}"

    print("KERNEL_OK")
</pallas_src>

<mosaic_0001>
module attributes {stable_mosaic.version = 11 : i64} {
  func.func @_vit_output_kernel(%arg0: i32, %arg1: memref<200x256xbf16, #tpu.memory_space<vmem>>, %arg2: memref<256x128xbf16, #tpu.memory_space<vmem>>, %arg3: memref<1x128xf32, #tpu.memory_space<vmem>>, %arg4: memref<200x128xf32, #tpu.memory_space<vmem>>, %arg5: memref<200x128xf32, #tpu.memory_space<vmem>>) attributes {dimension_semantics = [#tpu.dimension_semantics<parallel>], iteration_bounds = array<i64: 1>, scalar_prefetch = 0 : i64, scratch_operands = 0 : i64, tpu.core_type = #tpu.core_type<tc>, window_params = [{transform_indices = @transform_0, window_bounds = array<i64: 200, 256>}, {pipeline_mode = #tpu.pipeline_mode<synchronous>, transform_indices = @transform_1, window_bounds = array<i64: 256, 128>}, {pipeline_mode = #tpu.pipeline_mode<synchronous>, transform_indices = @transform_2, window_bounds = array<i64: 1, 128>}, {transform_indices = @transform_3, window_bounds = array<i64: 200, 128>}, {transform_indices = @transform_4, window_bounds = array<i64: 200, 128>}]} {
    %c0 = arith.constant 0 : index
    %c0_0 = arith.constant 0 : index
    %0 = vector.load %arg1[%c0, %c0_0] : memref<200x256xbf16, #tpu.memory_space<vmem>>, vector<200x256xbf16>
    %c0_1 = arith.constant 0 : index
    %c0_2 = arith.constant 0 : index
    %1 = vector.load %arg2[%c0_1, %c0_2] : memref<256x128xbf16, #tpu.memory_space<vmem>>, vector<256x128xbf16>
    %cst = arith.constant dense<0.000000e+00> : vector<200x128xf32>
    %2 = tpu.matmul %0, %1, %cst {dimension_numbers = #tpu.dot_dimension_numbers<[1], [0], [0], [1], [0, 0, 1, 1], [], []>} : vector<200x256xbf16>, vector<256x128xbf16>, vector<200x128xf32> -> vector<200x128xf32>
    %c0_3 = arith.constant 0 : index
    %c0_4 = arith.constant 0 : index
    %3 = vector.load %arg3[%c0_3, %c0_4] : memref<1x128xf32, #tpu.memory_space<vmem>>, vector<1x128xf32>
    %4 = vector.broadcast %3 : vector<1x128xf32> to vector<200x128xf32>
    %5 = arith.addf %2, %4 : vector<200x128xf32>
    %c0_5 = arith.constant 0 : index
    %c0_6 = arith.constant 0 : index
    %6 = vector.load %arg4[%c0_5, %c0_6] : memref<200x128xf32, #tpu.memory_space<vmem>>, vector<200x128xf32>
    %7 = arith.addf %5, %6 : vector<200x128xf32>
    %c0_7 = arith.constant 0 : index
    %c0_8 = arith.constant 0 : index
    %8 = vector.load %arg5[%c0_7, %c0_8] : memref<200x128xf32, #tpu.memory_space<vmem>>, vector<200x128xf32>
    tpu.vector_store %arg5[%c0_7, %c0_8], %7 {strides = array<i32>} : memref<200x128xf32, #tpu.memory_space<vmem>>, vector<200x128xf32>,
    return
  }
  func.func @transform_0(%arg0: i32) -> (i32, i32) {
    %c0_i32 = arith.constant 0 : i32
    %c0_i32_0 = arith.constant 0 : i32
    return %arg0, %c0_i32 : i32, i32
  }
  func.func @transform_1(%arg0: i32) -> (i32, i32) {
    %c0_i32 = arith.constant 0 : i32
    %c0_i32_0 = arith.constant 0 : i32
    %c0_i32_1 = arith.constant 0 : i32
    return %c0_i32, %c0_i32_0 : i32, i32
  }
  func.func @transform_2(%arg0: i32) -> (i32, i32) {
    %c0_i32 = arith.constant 0 : i32
    %c0_i32_0 = arith.constant 0 : i32
    %c0_i32_1 = arith.constant 0 : i32
    return %c0_i32, %c0_i32_0 : i32, i32
  }
  func.func @transform_3(%arg0: i32) -> (i32, i32) {
    %c0_i32 = arith.constant 0 : i32
    %c0_i32_0 = arith.constant 0 : i32
    return %arg0, %c0_i32 : i32, i32
  }
  func.func @transform_4(%arg0: i32) -> (i32, i32) {
    %c0_i32 = arith.constant 0 : i32
    %c0_i32_0 = arith.constant 0 : i32
    return %arg0, %c0_i32 : i32, i32
  }
}

</mosaic_0001>

<llo_original>
// kernel: vit_output.1
$region0: #{vit_output.1}
  #allocation0 [shape = 'u32[]', space=smem, size = 0x4, offset = 0x4, fixed_abs, tag = 'smem constant byte address 0x4 - core index']
  #allocation1 [shape = 'u32[144,128]{1,0:T(1,128)}', space=vmem, size = 0x12000, scoped, tag = 'internal scratch']
  %s0 = inlined_call_operand.vmem [shape: bf16[200,256], index: 0, kind: input, shape index: {}]
  %s1 = inlined_call_operand.vmem [shape: bf16[256,128], index: 1, kind: input, shape index: {}]
  %s2 = inlined_call_operand.vmem [shape: f32[1,128], index: 2, kind: input, shape index: {}]
  %s3 = inlined_call_operand.vmem [shape: f32[200,128], index: 3, kind: input, shape index: {}]
  %s4 = inlined_call_operand.vmem [shape: f32[200,128], index: 4, kind: output, shape index: {}]
  %s5 = sld [smem:[#allocation0]]
  $region26: #{vit_output.1} parent=0
    _
  %s7 = ssub.s32 1, %s5
  %s8 = scalar_select 0, %s7, %s5
  // Predicated region
  $region2: #{vit_output.1} parent=0 // pred_check
    _
  $region3: #{vit_output.1} parent=0 // pred_check_branch
    %10 = sbr.rel (0) target = $region5
  $region4: #{vit_output.1} parent=0 // pred_region
    _
  $region5: #{vit_output.1} parent=0 // pred_fallthru
    _
  // Predicated region
  $region6: #{vit_output.1} parent=0 // pred_check
    _
  $region7: #{vit_output.1} parent=0 // pred_check_branch
    %12 = sbr.rel (0) target = $region9
  $region8: #{vit_output.1} parent=0 // pred_region
    _
  $region9: #{vit_output.1} parent=0 // pred_fallthru
    _
  // Predicated region
  $region10: #{vit_output.1} parent=0 // pred_check
    _
  $region11: #{vit_output.1} parent=0 // pred_check_branch
    %14 = sbr.rel (0) target = $region13
  $region12: #{vit_output.1} parent=0 // pred_region
    _
  $region13: #{vit_output.1} parent=0 // pred_fallthru
    _
  // Predicated region
  $region14: #{vit_output.1} parent=0 // pred_check
    _
  $region15: #{vit_output.1} parent=0 // pred_check_branch
    %16 = sbr.rel (0) target = $region17
  $region16: #{vit_output.1} parent=0 // pred_region
    _
  $region17: #{vit_output.1} parent=0 // pred_fallthru
    _
  %v18 = vld [vmem:[%s0] sm:$0xff]
  %v19 = vld [vmem:[%s0 + $0x8] sm:$0xff]
  %v20 = vld [vmem:[%s0 + $0x10] sm:$0xff]
  %v21 = vld [vmem:[%s0 + $0x18] sm:$0xff]
  %v22 = vld [vmem:[%s0 + $0x20] sm:$0xff]
  %v23 = vld [vmem:[%s0 + $0x28] sm:$0xff]
  %v24 = vld [vmem:[%s0 + $0x30] sm:$0xff]
  %v25 = vld [vmem:[%s0 + $0x38] sm:$0xff]
  %v26 = vld [vmem:[%s0 + $0x40] sm:$0xff]
  %v27 = vld [vmem:[%s0 + $0x48] sm:$0xff]
  %v28 = vld [vmem:[%s0 + $0x50] sm:$0xff]
  %v29 = vld [vmem:[%s0 + $0x58] sm:$0xff]
  %v30 = vld [vmem:[%s0 + $0x60] sm:$0xff]
  %v31 = vld [vmem:[%s0 + $0x68] sm:$0xff]
  %v32 = vld [vmem:[%s0 + $0x70] sm:$0xff]
  %v33 = vld [vmem:[%s0 + $0x78] sm:$0xff]
  %v34 = vld [vmem:[%s0 + $0x80] sm:$0xff]
  %v35 = vld [vmem:[%s0 + $0x88] sm:$0xff]
  %v36 = vld [vmem:[%s0 + $0x90] sm:$0xff]
  %v37 = vld [vmem:[%s0 + $0x98] sm:$0xff]
  %v38 = vld [vmem:[%s0 + $0xa0] sm:$0xff]
  %v39 = vld [vmem:[%s0 + $0xa8] sm:$0xff]
  %v40 = vld [vmem:[%s0 + $0xb0] sm:$0xff]
  %v41 = vld [vmem:[%s0 + $0xb8] sm:$0xff]
  %v42 = vld [vmem:[%s0 + $0xc0] sm:$0xff]
  %v43 = vld [vmem:[%s1] sm:$0xf]
  %v44 = vld [vmem:[%s1 + $0x4] sm:$0xf]
  %v45 = vld [vmem:[%s1 + $0x8] sm:$0xf]
  %v46 = vld [vmem:[%s1 + $0xc] sm:$0xf]
  %v47 = vld [vmem:[%s1 + $0x10] sm:$0xf]
  %v48 = vld [vmem:[%s1 + $0x14] sm:$0xf]
  %v49 = vld [vmem:[%s1 + $0x18] sm:$0xf]
  %v50 = vld [vmem:[%s1 + $0x1c] sm:$0xf]
  %v51 = vld [vmem:[%s1 + $0x20] sm:$0xf]
  %v52 = vld [vmem:[%s1 + $0x24] sm:$0xf]
  %v53 = vld [vmem:[%s1 + $0x28] sm:$0xf]
  %v54 = vld [vmem:[%s1 + $0x2c] sm:$0xf]
  %v55 = vld [vmem:[%s1 + $0x30] sm:$0xf]
  %v56 = vld [vmem:[%s1 + $0x34] sm:$0xf]
  %v57 = vld [vmem:[%s1 + $0x38] sm:$0xf]
  %v58 = vld [vmem:[%s1 + $0x3c] sm:$0xf]
  %v59 = vld [vmem:[%s1 + $0x40] sm:$0xf]
  %v60 = vld [vmem:[%s1 + $0x44] sm:$0xf]
  %v61 = vld [vmem:[%s1 + $0x48] sm:$0xf]
  %v62 = vld [vmem:[%s1 + $0x4c] sm:$0xf]
  %v63 = vld [vmem:[%s1 + $0x50] sm:$0xf]
  %v64 = vld [vmem:[%s1 + $0x54] sm:$0xf]
  %v65 = vld [vmem:[%s1 + $0x58] sm:$0xf]
  %v66 = vld [vmem:[%s1 + $0x5c] sm:$0xf]
  %v67 = vld [vmem:[%s1 + $0x60] sm:$0xf]
  %v68 = vld [vmem:[%s1 + $0x64] sm:$0xf]
  %v69 = vld [vmem:[%s1 + $0x68] sm:$0xf]
  %v70 = vld [vmem:[%s1 + $0x6c] sm:$0xf]
  %v71 = vld [vmem:[%s1 + $0x70] sm:$0xf]
  %v72 = vld [vmem:[%s1 + $0x74] sm:$0xf]
  %v73 = vld [vmem:[%s1 + $0x78] sm:$0xf]
  %v74 = vld [vmem:[%s1 + $0x7c] sm:$0xf]
  %v75 = vld [vmem:[%s2] sm:$0x1]
  %v77 = vlaneseq
  %v78 = vshrl.u32 %v77, 7
  %v79 = vsub.s32 0, %v78
  %v80 = vrot.slane %v75, %v79
  %v107 = vunpack.c.l.b16 %v18
  %v108 = vunpack.c.h.b16 %v18
  %v109 = vunpack.c.l.b16 %v19
  %v110 = vunpack.c.h.b16 %v19
  %v111 = vunpack.c.l.b16 %v20
  %v112 = vunpack.c.h.b16 %v20
  %v113 = vunpack.c.l.b16 %v21
  %v114 = vunpack.c.h.b16 %v21
  %v115 = vunpack.c.l.b16 %v22
  %v116 = vunpack.c.h.b16 %v22
  %v117 = vunpack.c.l.b16 %v23
  %v118 = vunpack.c.h.b16 %v23
  %v119 = vunpack.c.l.b16 %v24
  %v120 = vunpack.c.h.b16 %v24
  %v121 = vunpack.c.l.b16 %v25
  %v122 = vunpack.c.h.b16 %v25
  %v123 = vunpack.c.l.b16 %v26
  %v124 = vunpack.c.h.b16 %v26
  %v125 = vunpack.c.l.b16 %v27
  %v126 = vunpack.c.h.b16 %v27
  %v127 = vunpack.c.l.b16 %v28
  %v128 = vunpack.c.h.b16 %v28
  %v129 = vunpack.c.l.b16 %v29
  %v130 = vunpack.c.h.b16 %v29
  %v131 = vunpack.c.l.b16 %v30
  %v132 = vunpack.c.h.b16 %v30
  %v133 = vunpack.c.l.b16 %v31
  %v134 = vunpack.c.h.b16 %v31
  %v135 = vunpack.c.l.b16 %v32
  %v136 = vunpack.c.h.b16 %v32
  %v137 = vunpack.c.l.b16 %v33
  %v138 = vunpack.c.h.b16 %v33
  %v139 = vunpack.c.l.b16 %v34
  %v140 = vunpack.c.h.b16 %v34
  %v141 = vunpack.c.l.b16 %v35
  %v142 = vunpack.c.h.b16 %v35
  %v143 = vunpack.c.l.b16 %v36
  %v144 = vunpack.c.h.b16 %v36
  %v145 = vunpack.c.l.b16 %v37
  %v146 = vunpack.c.h.b16 %v37
  %v147 = vunpack.c.l.b16 %v38
  %v148 = vunpack.c.h.b16 %v38
  %v149 = vunpack.c.l.b16 %v39
  %v150 = vunpack.c.h.b16 %v39
  %v151 = vunpack.c.l.b16 %v40
  %v152 = vunpack.c.h.b16 %v40
  %v153 = vunpack.c.l.b16 %v41
  %v154 = vunpack.c.h.b16 %v41
  %v155 = vunpack.c.l.b16 %v42
  %v156 = vunpack.c.h.b16 %v42
  %v157 = vpack.c.b16 %v109, %v107
  %v158 = vpack.c.b16 %v110, %v108
  %v159 = vpack.c.b16 %v113, %v111
  %v160 = vpack.c.b16 %v114, %v112
  %v161 = vpack.c.b16 %v117, %v115
  %v162 = vpack.c.b16 %v118, %v116
  %v163 = vpack.c.b16 %v121, %v119
  %v164 = vpack.c.b16 %v122, %v120
  %v165 = vpack.c.b16 %v125, %v123
  %v166 = vpack.c.b16 %v126, %v124
  %v167 = vpack.c.b16 %v129, %v127
  %v168 = vpack.c.b16 %v130, %v128
  %v169 = vpack.c.b16 %v133, %v131
  %v170 = vpack.c.b16 %v134, %v132
  %v171 = vpack.c.b16 %v137, %v135
  %v172 = vpack.c.b16 %v138, %v136
  %v173 = vpack.c.b16 %v141, %v139
  %v174 = vpack.c.b16 %v142, %v140
  %v175 = vpack.c.b16 %v145, %v143
  %v176 = vpack.c.b16 %v146, %v144
  %v177 = vpack.c.b16 %v149, %v147
  %v178 = vpack.c.b16 %v150, %v148
  %v179 = vpack.c.b16 %v153, %v151
  %v180 = vpack.c.b16 %v154, %v152
  %v181 = vpack.c.b16 %v155, %v155
  %v182 = vpack.c.b16 %v156, %v156
  %v241 = vunpack.c.l.b16 %v43
  %v242 = vunpack.c.l.b16 %v44
  %v243 = vunpack.c.l.b16 %v45
  %v244 = vunpack.c.l.b16 %v46
  %v245 = vunpack.c.l.b16 %v47
  %v246 = vunpack.c.l.b16 %v48
  %v247 = vunpack.c.l.b16 %v49
  %v248 = vunpack.c.l.b16 %v50
  %v249 = vunpack.c.l.b16 %v51
  %v250 = vunpack.c.l.b16 %v52
  %v251 = vunpack.c.l.b16 %v53
  %v252 = vunpack.c.l.b16 %v54
  %v253 = vunpack.c.l.b16 %v55
  %v254 = vunpack.c.l.b16 %v56
  %v255 = vunpack.c.l.b16 %v57
  %v256 = vunpack.c.l.b16 %v58
  %v257 = vunpack.c.l.b16 %v59
  %v258 = vunpack.c.l.b16 %v60
  %v259 = vunpack.c.l.b16 %v61
  %v260 = vunpack.c.l.b16 %v62
  %v261 = vunpack.c.l.b16 %v63
  %v262 = vunpack.c.l.b16 %v64
  %v263 = vunpack.c.l.b16 %v65
  %v264 = vunpack.c.l.b16 %v66
  %v265 = vunpack.c.l.b16 %v67
  %v266 = vunpack.c.l.b16 %v68
  %v267 = vunpack.c.l.b16 %v69
  %v268 = vunpack.c.l.b16 %v70
  %v269 = vunpack.c.l.b16 %v71
  %v270 = vunpack.c.l.b16 %v72
  %v271 = vunpack.c.l.b16 %v73
  %v272 = vunpack.c.l.b16 %v74
  %v273 = vpack.c.b16 %v242, %v241
  %v274 = vpack.c.b16 %v244, %v243
  %v275 = vpack.c.b16 %v246, %v245
  %v276 = vpack.c.b16 %v248, %v247
  %v277 = vpack.c.b16 %v250, %v249
  %v278 = vpack.c.b16 %v252, %v251
  %v279 = vpack.c.b16 %v254, %v253
  %v280 = vpack.c.b16 %v256, %v255
  %v281 = vpack.c.b16 %v258, %v257
  %v282 = vpack.c.b16 %v260, %v259
  %v283 = vpack.c.b16 %v262, %v261
  %v284 = vpack.c.b16 %v264, %v263
  %v285 = vpack.c.b16 %v266, %v265
  %v286 = vpack.c.b16 %v268, %v267
  %v287 = vpack.c.b16 %v270, %v269
  %v288 = vpack.c.b16 %v272, %v271
  %305 = vmatprep.subr.bf16.mxu0 0
  %306 = vmatpush1.bf16.msra.mxu0 %v273
  %307 = vmatprep.subr.bf16.mxu0 0
  %308 = vmatpush1.bf16.msra.mxu0 %v274
  %309 = vmatprep.subr.bf16.mxu0 0
  %310 = vmatpush1.bf16.msra.mxu0 %v275
  %311 = vmatprep.subr.bf16.mxu0 0
  %312 = vmatpush1.bf16.msra.mxu0 %v276
  %313 = vmatprep.subr.bf16.mxu0 0
  %314 = vmatpush1.bf16.msra.mxu0 %v277
  %315 = vmatprep.subr.bf16.mxu0 0
  %316 = vmatpush1.bf16.msra.mxu0 %v278
  %317 = vmatprep.subr.bf16.mxu0 0
  %318 = vmatpush1.bf16.msra.mxu0 %v279
  %319 = vmatprep.subr.bf16.mxu0 0
  %320 = vmatpush1.bf16.msra.mxu0 %v280
  %321 = vmatprep.subr.bf16.mxu0 0
  %322 = vmatpush1.bf16.msra.mxu0 %v281
  %323 = vmatprep.subr.bf16.mxu0 0
  %324 = vmatpush1.bf16.msra.mxu0 %v282
  %325 = vmatprep.subr.bf16.mxu0 0
  %326 = vmatpush1.bf16.msra.mxu0 %v283
  %327 = vmatprep.subr.bf16.mxu0 0
  %328 = vmatpush1.bf16.msra.mxu0 %v284
  %329 = vmatprep.subr.bf16.mxu0 0
  %330 = vmatpush1.bf16.msra.mxu0 %v285
  %331 = vmatprep.subr.bf16.mxu0 0
  %332 = vmatpush1.bf16.msra.mxu0 %v286
  %333 = vmatprep.subr.bf16.mxu0 0
  %334 = vmatpush1.bf16.msra.mxu0 %v287
  %335 = vmatprep.subr.bf16.mxu0 0
  %336 = vmatpush1.bf16.msra.mxu0 %v288
  %337 = vmatprep.mubr.bf16.mxu0 %v158
  %338 = vmatmul.mubr.bf16.gmra.mrb[0].mxu0 %v157
  %v339 = vpop.f32.mrb[0].mxu0
  %v340 = vadd.f32 %v80, %v339
  %v341 = vpop.f32.mrb[0].mxu0
  %v342 = vpop.f32.mrb[0].mxu0
  %v343 = vadd.f32 %v80, %v342
  %v344 = vpop.f32.mrb[0].mxu0
  %345 = vmatprep.mubr.bf16.mxu0 %v160
  %346 = vmatmul.mubr.bf16.gmra.mrb[0].mxu0 %v159
  %v347 = vpop.f32.mrb[0].mxu0
  %v348 = vadd.f32 %v80, %v347
  %v349 = vpop.f32.mrb[0].mxu0
  %v350 = vpop.f32.mrb[0].mxu0
  %v351 = vadd.f32 %v80, %v350
  %v352 = vpop.f32.mrb[0].mxu0
  %353 = vmatprep.mubr.bf16.mxu0 %v162
  %354 = vmatmul.mubr.bf16.gmra.mrb[0].mxu0 %v161
  %v355 = vpop.f32.mrb[0].mxu0
  %v356 = vadd.f32 %v80, %v355
  %v357 = vpop.f32.mrb[0].mxu0
  %v358 = vpop.f32.mrb[0].mxu0
  %v359 = vadd.f32 %v80, %v358
  %v360 = vpop.f32.mrb[0].mxu0
  %361 = vmatprep.mubr.bf16.mxu0 %v164
  %362 = vmatmul.mubr.bf16.gmra.mrb[0].mxu0 %v163
  %v363 = vpop.f32.mrb[0].mxu0
  %v364 = vadd.f32 %v80, %v363
  %v365 = vpop.f32.mrb[0].mxu0
  %v366 = vpop.f32.mrb[0].mxu0
  %v367 = vadd.f32 %v80, %v366
  %v368 = vpop.f32.mrb[0].mxu0
  %369 = vmatprep.mubr.bf16.mxu0 %v166
  %370 = vmatmul.mubr.bf16.gmra.mrb[0].mxu0 %v165
  %v371 = vpop.f32.mrb[0].mxu0
  %v372 = vadd.f32 %v80, %v371
  %v373 = vpop.f32.mrb[0].mxu0
  %v374 = vpop.f32.mrb[0].mxu0
  %v375 = vadd.f32 %v80, %v374
  %v376 = vpop.f32.mrb[0].mxu0
  %377 = vmatprep.mubr.bf16.mxu0 %v168
  %378 = vmatmul.mubr.bf16.gmra.mrb[0].mxu0 %v167
  %v379 = vpop.f32.mrb[0].mxu0
  %v380 = vadd.f32 %v80, %v379
  %v381 = vpop.f32.mrb[0].mxu0
  %v382 = vpop.f32.mrb[0].mxu0
  %v383 = vadd.f32 %v80, %v382
  %v384 = vpop.f32.mrb[0].mxu0
  %385 = vmatprep.mubr.bf16.mxu0 %v170
  %386 = vmatmul.mubr.bf16.gmra.mrb[0].mxu0 %v169
  %v387 = vpop.f32.mrb[0].mxu0
  %v388 = vadd.f32 %v80, %v387
  %v389 = vpop.f32.mrb[0].mxu0
  %v390 = vpop.f32.mrb[0].mxu0
  %v391 = vadd.f32 %v80, %v390
  %v392 = vpop.f32.mrb[0].mxu0
  %393 = vmatprep.mubr.bf16.mxu0 %v172
  %394 = vmatmul.mubr.bf16.gmra.mrb[0].mxu0 %v171
  %v395 = vpop.f32.mrb[0].mxu0
  %v396 = vadd.f32 %v80, %v395
  %v397 = vpop.f32.mrb[0].mxu0
  %v398 = vpop.f32.mrb[0].mxu0
  %v399 = vadd.f32 %v80, %v398
  %v400 = vpop.f32.mrb[0].mxu0
  %401 = vmatprep.mubr.bf16.mxu0 %v174
  %402 = vmatmul.mubr.bf16.gmra.mrb[0].mxu0 %v173
  %v403 = vpop.f32.mrb[0].mxu0
  %v404 = vadd.f32 %v80, %v403
  %v405 = vpop.f32.mrb[0].mxu0
  %v406 = vpop.f32.mrb[0].mxu0
  %v407 = vadd.f32 %v80, %v406
  %v408 = vpop.f32.mrb[0].mxu0
  %409 = vmatprep.mubr.bf16.mxu0 %v176
  %410 = vmatmul.mubr.bf16.gmra.mrb[0].mxu0 %v175
  %v411 = vpop.f32.mrb[0].mxu0
  %v412 = vadd.f32 %v80, %v411
  %v413 = vpop.f32.mrb[0].mxu0
  %v414 = vpop.f32.mrb[0].mxu0
  %v415 = vadd.f32 %v80, %v414
  %v416 = vpop.f32.mrb[0].mxu0
  %417 = vmatprep.mubr.bf16.mxu0 %v178
  %418 = vmatmul.mubr.bf16.gmra.mrb[0].mxu0 %v177
  %v419 = vpop.f32.mrb[0].mxu0
  %v420 = vadd.f32 %v80, %v419
  %v421 = vpop.f32.mrb[0].mxu0
  %v422 = vpop.f32.mrb[0].mxu0
  %v423 = vadd.f32 %v80, %v422
  %v424 = vpop.f32.mrb[0].mxu0
  %425 = vmatprep.mubr.bf16.mxu0 %v180
  %426 = vmatmul.mubr.bf16.gmra.mrb[0].mxu0 %v179
  %v427 = vpop.f32.mrb[0].mxu0
  %v428 = vadd.f32 %v80, %v427
  %v429 = vpop.f32.mrb[0].mxu0
  %v430 = vpop.f32.mrb[0].mxu0
  %v431 = vadd.f32 %v80, %v430
  %v432 = vpop.f32.mrb[0].mxu0
  %433 = vmatprep.mubr.bf16.mxu0 %v182
  %434 = vmatmul.mubr.bf16.gmra.mrb[0].mxu0 %v181
  %v435 = vpop.f32.mrb[0].mxu0
  %v436 = vadd.f32 %v80, %v435
  %v437 = vpop.f32.mrb[0].mxu0
  %v438 = vpop.f32.mrb[0].mxu0
  %v439 = vpop.f32.mrb[0].mxu0
  %440 = vdwg.mxu0
  %v441 = vld [vmem:[%s3] sm:$0xff]
  %v442 = vld [vmem:[%s3 + $0x8] sm:$0xff]
  %v443 = vld [vmem:[%s3 + $0x10] sm:$0xff]
  %v444 = vld [vmem:[%s3 + $0x18] sm:$0xff]
  %v445 = vld [vmem:[%s3 + $0x20] sm:$0xff]
  %v446 = vld [vmem:[%s3 + $0x28] sm:$0xff]
  %v447 = vld [vmem:[%s3 + $0x30] sm:$0xff]
  %v448 = vld [vmem:[%s3 + $0x38] sm:$0xff]
  %v449 = vld [vmem:[%s3 + $0x40] sm:$0xff]
  %v450 = vld [vmem:[%s3 + $0x48] sm:$0xff]
  %v451 = vld [vmem:[%s3 + $0x50] sm:$0xff]
  %v452 = vld [vmem:[%s3 + $0x58] sm:$0xff]
  %v453 = vld [vmem:[%s3 + $0x60] sm:$0xff]
  %v454 = vld [vmem:[%s3 + $0x68] sm:$0xff]
  %v455 = vld [vmem:[%s3 + $0x70] sm:$0xff]
  %v456 = vld [vmem:[%s3 + $0x78] sm:$0xff]
  %v457 = vld [vmem:[%s3 + $0x80] sm:$0xff]
  %v458 = vld [vmem:[%s3 + $0x88] sm:$0xff]
  %v459 = vld [vmem:[%s3 + $0x90] sm:$0xff]
  %v460 = vld [vmem:[%s3 + $0x98] sm:$0xff]
  %v461 = vld [vmem:[%s3 + $0xa0] sm:$0xff]
  %v462 = vld [vmem:[%s3 + $0xa8] sm:$0xff]
  %v463 = vld [vmem:[%s3 + $0xb0] sm:$0xff]
  %v464 = vld [vmem:[%s3 + $0xb8] sm:$0xff]
  %v465 = vld [vmem:[%s3 + $0xc0] sm:$0xff]
  %v466 = vadd.f32 %v340, %v441
  %v467 = vadd.f32 %v343, %v442
  %v468 = vadd.f32 %v348, %v443
  %v469 = vadd.f32 %v351, %v444
  %v470 = vadd.f32 %v356, %v445
  %v471 = vadd.f32 %v359, %v446
  %v472 = vadd.f32 %v364, %v447
  %v473 = vadd.f32 %v367, %v448
  %v474 = vadd.f32 %v372, %v449
  %v475 = vadd.f32 %v375, %v450
  %v476 = vadd.f32 %v380, %v451
  %v477 = vadd.f32 %v383, %v452
  %v478 = vadd.f32 %v388, %v453
  %v479 = vadd.f32 %v391, %v454
  %v480 = vadd.f32 %v396, %v455
  %v481 = vadd.f32 %v399, %v456
  %v482 = vadd.f32 %v404, %v457
  %v483 = vadd.f32 %v407, %v458
  %v484 = vadd.f32 %v412, %v459
  %v485 = vadd.f32 %v415, %v460
  %v486 = vadd.f32 %v420, %v461
  %v487 = vadd.f32 %v423, %v462
  %v488 = vadd.f32 %v428, %v463
  %v489 = vadd.f32 %v431, %v464
  %v490 = vadd.f32 %v436, %v465
  %491 = vst [vmem:[%s4] sm:$0xff] %v466
  %492 = vst [vmem:[%s4 + $0x8] sm:$0xff] %v467
  %493 = vst [vmem:[%s4 + $0x10] sm:$0xff] %v468
  %494 = vst [vmem:[%s4 + $0x18] sm:$0xff] %v469
  %495 = vst [vmem:[%s4 + $0x20] sm:$0xff] %v470
  %496 = vst [vmem:[%s4 + $0x28] sm:$0xff] %v471
  %497 = vst [vmem:[%s4 + $0x30] sm:$0xff] %v472
  %498 = vst [vmem:[%s4 + $0x38] sm:$0xff] %v473
  %499 = vst [vmem:[%s4 + $0x40] sm:$0xff] %v474
  %500 = vst [vmem:[%s4 + $0x48] sm:$0xff] %v475
  %501 = vst [vmem:[%s4 + $0x50] sm:$0xff] %v476
  %502 = vst [vmem:[%s4 + $0x58] sm:$0xff] %v477
  %503 = vst [vmem:[%s4 + $0x60] sm:$0xff] %v478
  %504 = vst [vmem:[%s4 + $0x68] sm:$0xff] %v479
  %505 = vst [vmem:[%s4 + $0x70] sm:$0xff] %v480
  %506 = vst [vmem:[%s4 + $0x78] sm:$0xff] %v481
  %507 = vst [vmem:[%s4 + $0x80] sm:$0xff] %v482
  %508 = vst [vmem:[%s4 + $0x88] sm:$0xff] %v483
  %509 = vst [vmem:[%s4 + $0x90] sm:$0xff] %v484
  %510 = vst [vmem:[%s4 + $0x98] sm:$0xff] %v485
  %511 = vst [vmem:[%s4 + $0xa0] sm:$0xff] %v486
  %512 = vst [vmem:[%s4 + $0xa8] sm:$0xff] %v487
  %513 = vst [vmem:[%s4 + $0xb0] sm:$0xff] %v488
  %514 = vst [vmem:[%s4 + $0xb8] sm:$0xff] %v489
  %515 = vst [vmem:[%s4 + $0xc0] sm:$0xff] %v490
  // Predicated region
  $region18: #{vit_output.1} parent=0 // pred_check
    _
  $region19: #{vit_output.1} parent=0 // pred_check_branch
    %517 = sbr.rel (0) target = $region21
  $region20: #{vit_output.1} parent=0 // pred_region
    _
  $region21: #{vit_output.1} parent=0 // pred_fallthru
    _
  // Predicated region
  $region22: #{vit_output.1} parent=0 // pred_check
    _
  $region23: #{vit_output.1} parent=0 // pred_check_branch
    %519 = sbr.rel (0) target = $region25
  $region24: #{vit_output.1} parent=0 // pred_region
    _
  $region25: #{vit_output.1} parent=0 // pred_fallthru
    _

</llo_original>
